<compile_context>
chip_gen: v7x
topology: tpu7x:2x2x1
jax: 0.10.0
libtpu: 0.0.40
codegen_flags: <defaults>
</compile_context>

<pallas_src>
import jax
import jax.numpy as jnp
from jax.experimental import pallas as pl
from jax.experimental.pallas import tpu as pltpu


def _round_up(x, m):
    return (x + m - 1) // m * m


def _cdiv(a, b):
    return -(-a // b)


def _choose_tile(E, tile_e_max):
    """Pick an edge-tile from a small candidate set: prefer large tiles and
    >=2 grid steps (megacore) while bounding E-padding waste."""
    E8 = _round_up(max(int(E), 1), 8)
    tile_max = max(8, _round_up(int(tile_e_max), 8))
    if E8 <= min(512, tile_max):
        return E8                                   # tiny problem: 1 block, 0 waste
    cands = {t for t in (256, 512, 1024, 2048, 4096, 8192) if t <= tile_max}
    for parts in (2, 4, 8):                         # near-zero-waste splits of E8
        cands.add(min(tile_max, _round_up(_cdiv(E8, parts), 8)))
    cands.add(min(tile_max, E8))
    # Prefer >=2 grid steps so both v7x TensorCores get work.
    viable = [t for t in cands if _cdiv(E8, t) >= 2] or list(cands)
    # Largest tile whose padding waste stays small; else minimal waste.
    for t in sorted(viable, reverse=True):
        if _round_up(E8, t) - E8 <= max(8, 0.03 * E8):
            return t
    return min(viable, key=lambda t: (_round_up(E8, t) - E8, -t))


# ---------------------------------------------------------------------------
# Kernels (fused: 3x accumulating dot (== concat) -> +b -> ReLU -> dot -> +b
#          -> ReLU [-> row mask])
# ---------------------------------------------------------------------------
def _edge_mlp_kernel(src_ref, dst_ref, e_ref, w1s_ref, w1d_ref, w1e_ref,
                     b1_ref, w2_ref, b2_ref, out_ref):
    mm = w1s_ref.dtype
    # Layer 1: three accumulating dots replace the concat (single f32 acc).
    h = jnp.dot(src_ref[...].astype(mm), w1s_ref[...],
                preferred_element_type=jnp.float32)
    h += jnp.dot(dst_ref[...].astype(mm), w1d_ref[...],
                 preferred_element_type=jnp.float32)
    h += jnp.dot(e_ref[...].astype(mm), w1e_ref[...],
                 preferred_element_type=jnp.float32)
    h = jnp.maximum(h + b1_ref[...], 0.0)           # bias + ReLU in f32 (VPU)
    # (Dropout: identity in eval mode.)
    # Layer 2
    o = jnp.dot(h.astype(w2_ref.dtype), w2_ref[...],
                preferred_element_type=jnp.float32)
    o = jnp.maximum(o + b2_ref[...], 0.0)
    out_ref[...] = o.astype(out_ref.dtype)


def _edge_mlp_kernel_masked(src_ref, dst_ref, e_ref, mask_ref, w1s_ref,
                            w1d_ref, w1e_ref, b1_ref, w2_ref, b2_ref,
                            out_ref):
    mm = w1s_ref.dtype
    h = jnp.dot(src_ref[...].astype(mm), w1s_ref[...],
                preferred_element_type=jnp.float32)
    h += jnp.dot(dst_ref[...].astype(mm), w1d_ref[...],
                 preferred_element_type=jnp.float32)
    h += jnp.dot(e_ref[...].astype(mm), w1e_ref[...],
                 preferred_element_type=jnp.float32)
    h = jnp.maximum(h + b1_ref[...], 0.0)
    o = jnp.dot(h.astype(w2_ref.dtype), w2_ref[...],
                preferred_element_type=jnp.float32)
    o = jnp.maximum(o + b2_ref[...], 0.0)
    out_ref[...] = (o * mask_ref[...]).astype(out_ref.dtype)   # zero filtered rows


# ---------------------------------------------------------------------------
# One-time parameter prep (hoisted out of the forward pass)
# ---------------------------------------------------------------------------
def prepare_edge_params(dense_params, input_dim_n, use_bf16=True):
    """dense_params = (w1 (Din,H1), b1 (1,H1), w2 (H1,H2), b2 (1,H2)) in f32.

    Splits W1 into the src/dest/edge blocks, pads H1 -> multiple of 128
    (h never touches HBM; H2 is left unpadded) and casts matmul operands to
    bf16 (biases stay f32).  Do this ONCE and reuse across forward calls.
    """
    w1, b1, w2, b2 = dense_params
    Dn = input_dim_n
    H1 = w1.shape[1]
    H1p = _round_up(H1, 128)
    mm = jnp.bfloat16 if use_bf16 else jnp.float32
    pad_cols = lambda a: jnp.pad(a, ((0, 0), (0, H1p - H1)))
    w1s = pad_cols(w1[:Dn]).astype(mm)
    w1d = pad_cols(w1[Dn:2 * Dn]).astype(mm)
    w1e = pad_cols(w1[2 * Dn:]).astype(mm)
    b1p = pad_cols(b1).astype(jnp.float32)
    w2p = jnp.pad(w2, ((0, H1p - H1), (0, 0))).astype(mm)
    b2p = b2.astype(jnp.float32)
    return (w1s, w1d, w1e, b1p, w2p, b2p)


# ---------------------------------------------------------------------------
# Forward wrapper
# ---------------------------------------------------------------------------
def edge_model_forward(src, dest, edge_attr, prepped_params, mask_edge=None,
                       *, tile_e=4096, out_dtype=jnp.float32):
    """src, dest: (E, Dn); edge_attr: (E, De); mask_edge: optional bool (E,).
    prepped_params: output of prepare_edge_params().  Returns (E, H2)."""
    w1s, w1d, w1e, b1p, w2p, b2p = prepped_params
    E, Dn = src.shape
    De = edge_attr.shape[1]
    H2 = w2p.shape[1]

    tile = _choose_tile(E, tile_e)
    E_pad = _round_up(E, tile)
    pad_rows = E_pad - E
    grid = (E_pad // tile,)

    if pad_rows:
        pad_r = lambda a: jnp.pad(a, ((0, pad_rows), (0, 0)))
        src, dest, edge_attr = pad_r(src), pad_r(dest), pad_r(edge_attr)

    row = lambda w: pl.BlockSpec((tile, w), lambda i: (i, 0))
    res = lambda a: pl.BlockSpec(a.shape, lambda i: (0, 0))   # VMEM-resident

    weight_specs = [res(w1s), res(w1d), res(w1e), res(b1p), res(w2p), res(b2p)]
    common = dict(
        out_shape=jax.ShapeDtypeStruct((E_pad, H2), out_dtype),
        grid=grid,
        out_specs=row(H2),
        compiler_params=pltpu.CompilerParams(
            dimension_semantics=("parallel",),
            vmem_limit_bytes=32 * 1024 * 1024),
    )

    if mask_edge is None:
        out = pl.pallas_call(
            _edge_mlp_kernel,
            in_specs=[row(Dn), row(Dn), row(De)] + weight_specs,
            **common,
        )(src, dest, edge_attr, w1s, w1d, w1e, b1p, w2p, b2p)
    else:
        mask = mask_edge.astype(jnp.float32)[:, None]          # (E, 1) f32
        if pad_rows:
            mask = jnp.pad(mask, ((0, pad_rows), (0, 0)))
        out = pl.pallas_call(
            _edge_mlp_kernel_masked,
            in_specs=[row(Dn), row(Dn), row(De), row(1)] + weight_specs,
            **common,
        )(src, dest, edge_attr, mask, w1s, w1d, w1e, b1p, w2p, b2p)

    # Only a (cheap, contiguous) leading-row slice, and only when E was padded.
    return out[:E] if pad_rows else out


# ---------------------------------------------------------------------------
# Params + reference
# ---------------------------------------------------------------------------
def init_params(key, input_dim_n, input_dim_e, e_mlp):
    """Deterministic init mimicking torch.nn.Linear.reset_parameters
    (uniform in +-1/sqrt(fan_in)).  Returns dense f32 params."""
    assert len(e_mlp) == 2, "this script instantiates the 2-layer MLP case"
    d_in = 2 * input_dim_n + input_dim_e
    h1, h2 = e_mlp
    ks = jax.random.split(key, 4)

    bound1 = 1.0 / jnp.sqrt(d_in)
    w1 = jax.random.uniform(ks[0], (d_in, h1), jnp.float32, -bound1, bound1)
    b1 = jax.random.uniform(ks[1], (1, h1), jnp.float32, -bound1, bound1)

    bound2 = 1.0 / jnp.sqrt(h1)
    w2 = jax.random.uniform(ks[2], (h1, h2), jnp.float32, -bound2, bound2)
    b2 = jax.random.uniform(ks[3], (1, h2), jnp.float32, -bound2, bound2)
    return (w1, b1, w2, b2)


def reference_forward(src, dest, edge_attr, dense_params, mask_edge=None):
    w1, b1, w2, b2 = dense_params
    x = jnp.concatenate([src, dest, edge_attr], axis=1)
    h = jnp.maximum(x @ w1 + b1, 0.0)
    o = jnp.maximum(h @ w2 + b2, 0.0)
    if mask_edge is not None:
        o = o * mask_edge.astype(o.dtype)[:, None]
    return o


if __name__ == "__main__":
    # Small shapes consistent with the module:
    #   E edges, node-feature dim Dn, edge-feature dim De, e_mlp=[64, 32].
    #   E=10 exercises the edge-padding path (not a multiple of 8).
    E, Dn, De = 10, 32, 16
    e_mlp = [64, 32]

    key = jax.random.PRNGKey(0)
    k_src, k_dst, k_e, k_m, k_p = jax.random.split(key, 5)
    src = jax.random.normal(k_src, (E, Dn), jnp.float32)
    dest = jax.random.normal(k_dst, (E, Dn), jnp.float32)
    edge_attr = jax.random.normal(k_e, (E, De), jnp.float32)
    mask_edge = jax.random.bernoulli(k_m, 0.5, (E,))

    params = init_params(k_p, Dn, De, e_mlp)

    ref = reference_forward(src, dest, edge_attr, params, None)
    ref_m = reference_forward(src, dest, edge_attr, params, mask_edge)

    # Parameter prep (split/pad/cast) is done once, outside the forward.
    prep_f32 = prepare_edge_params(params, Dn, use_bf16=False)
    prep_bf16 = prepare_edge_params(params, Dn, use_bf16=True)

    # f32 path: near-exact vs reference (unmasked + masked kernels).
    out_f32 = edge_model_forward(src, dest, edge_attr, prep_f32)
    out_f32_m = edge_model_forward(src, dest, edge_attr, prep_f32,
                                   mask_edge=mask_edge)
    # bf16 path (production setting): close to f32 reference.
    out_bf16_m = edge_model_forward(src, dest, edge_attr, prep_bf16,
                                    mask_edge=mask_edge)
    jax.block_until_ready((out_f32, out_f32_m, out_bf16_m))

    assert out_f32.shape == (E, e_mlp[-1])
    assert out_bf16_m.shape == (E, e_mlp[-1])
    assert jnp.allclose(out_f32, ref, atol=1e-4), "f32 unmasked mismatch"
    assert jnp.allclose(out_f32_m, ref_m, atol=1e-4), "f32 masked mismatch"
    assert jnp.allclose(out_bf16_m, ref_m, atol=5e-2, rtol=5e-2), \
        "bf16 masked mismatch"

    # Larger run: exercises the multi-step grid (megacore split) and the
    # E -> tile padding path.
    E2 = 1000
    k2 = jax.random.split(key, 4)
    src2 = jax.random.normal(k2[0], (E2, Dn), jnp.float32)
    dest2 = jax.random.normal(k2[1], (E2, Dn), jnp.float32)
    edge2 = jax.random.normal(k2[2], (E2, De), jnp.float32)
    mask2 = jax.random.bernoulli(k2[3], 0.5, (E2,))
    ref2 = reference_forward(src2, dest2, edge2, params, mask2)
    out2 = edge_model_forward(src2, dest2, edge2, prep_bf16, mask_edge=mask2)
    jax.block_until_ready(out2)
    assert out2.shape == (E2, e_mlp[-1])
    assert jnp.allclose(out2, ref2, atol=5e-2, rtol=5e-2), \
        "bf16 large masked mismatch"

    print("KERNEL_OK")
</pallas_src>

<mosaic_0001>
module attributes {stable_mosaic.version = 11 : i64} {
  func.func @_edge_mlp_kernel(%arg0: i32, %arg1: memref<16x32xf32, #tpu.memory_space<vmem>>, %arg2: memref<16x32xf32, #tpu.memory_space<vmem>>, %arg3: memref<16x16xf32, #tpu.memory_space<vmem>>, %arg4: memref<32x128xf32, #tpu.memory_space<vmem>>, %arg5: memref<32x128xf32, #tpu.memory_space<vmem>>, %arg6: memref<16x128xf32, #tpu.memory_space<vmem>>, %arg7: memref<1x128xf32, #tpu.memory_space<vmem>>, %arg8: memref<128x32xf32, #tpu.memory_space<vmem>>, %arg9: memref<1x32xf32, #tpu.memory_space<vmem>>, %arg10: memref<16x32xf32, #tpu.memory_space<vmem>>) attributes {dimension_semantics = [#tpu.dimension_semantics<parallel>], iteration_bounds = array<i64: 1>, scalar_prefetch = 0 : i64, scratch_operands = 0 : i64, tpu.core_type = #tpu.core_type<tc>, window_params = [{transform_indices = @transform_0, window_bounds = array<i64: 16, 32>}, {transform_indices = @transform_1, window_bounds = array<i64: 16, 32>}, {transform_indices = @transform_2, window_bounds = array<i64: 16, 16>}, {pipeline_mode = #tpu.pipeline_mode<synchronous>, transform_indices = @transform_3, window_bounds = array<i64: 32, 128>}, {pipeline_mode = #tpu.pipeline_mode<synchronous>, transform_indices = @transform_4, window_bounds = array<i64: 32, 128>}, {pipeline_mode = #tpu.pipeline_mode<synchronous>, transform_indices = @transform_5, window_bounds = array<i64: 16, 128>}, {pipeline_mode = #tpu.pipeline_mode<synchronous>, transform_indices = @transform_6, window_bounds = array<i64: 1, 128>}, {pipeline_mode = #tpu.pipeline_mode<synchronous>, transform_indices = @transform_7, window_bounds = array<i64: 128, 32>}, {pipeline_mode = #tpu.pipeline_mode<synchronous>, transform_indices = @transform_8, window_bounds = array<i64: 1, 32>}, {transform_indices = @transform_9, window_bounds = array<i64: 16, 32>}]} {
    %c0 = arith.constant 0 : index
    %c0_0 = arith.constant 0 : index
    %0 = vector.load %arg1[%c0, %c0_0] : memref<16x32xf32, #tpu.memory_space<vmem>>, vector<16x32xf32>
    %c0_1 = arith.constant 0 : index
    %c0_2 = arith.constant 0 : index
    %1 = vector.load %arg4[%c0_1, %c0_2] : memref<32x128xf32, #tpu.memory_space<vmem>>, vector<32x128xf32>
    %cst = arith.constant dense<0.000000e+00> : vector<16x128xf32>
    %2 = tpu.matmul %0, %1, %cst {dimension_numbers = #tpu.dot_dimension_numbers<[1], [0], [0], [1], [0, 0, 1, 1], [], []>} : vector<16x32xf32>, vector<32x128xf32>, vector<16x128xf32> -> vector<16x128xf32>
    %c0_3 = arith.constant 0 : index
    %c0_4 = arith.constant 0 : index
    %3 = vector.load %arg2[%c0_3, %c0_4] : memref<16x32xf32, #tpu.memory_space<vmem>>, vector<16x32xf32>
    %c0_5 = arith.constant 0 : index
    %c0_6 = arith.constant 0 : index
    %4 = vector.load %arg5[%c0_5, %c0_6] : memref<32x128xf32, #tpu.memory_space<vmem>>, vector<32x128xf32>
    %cst_7 = arith.constant dense<0.000000e+00> : vector<16x128xf32>
    %5 = tpu.matmul %3, %4, %cst_7 {dimension_numbers = #tpu.dot_dimension_numbers<[1], [0], [0], [1], [0, 0, 1, 1], [], []>} : vector<16x32xf32>, vector<32x128xf32>, vector<16x128xf32> -> vector<16x128xf32>
    %6 = arith.addf %2, %5 : vector<16x128xf32>
    %c0_8 = arith.constant 0 : index
    %c0_9 = arith.constant 0 : index
    %7 = vector.load %arg3[%c0_8, %c0_9] : memref<16x16xf32, #tpu.memory_space<vmem>>, vector<16x16xf32>
    %c0_10 = arith.constant 0 : index
    %c0_11 = arith.constant 0 : index
    %8 = vector.load %arg6[%c0_10, %c0_11] : memref<16x128xf32, #tpu.memory_space<vmem>>, vector<16x128xf32>
    %cst_12 = arith.constant dense<0.000000e+00> : vector<16x128xf32>
    %9 = tpu.matmul %7, %8, %cst_12 {dimension_numbers = #tpu.dot_dimension_numbers<[1], [0], [0], [1], [0, 0, 1, 1], [], []>} : vector<16x16xf32>, vector<16x128xf32>, vector<16x128xf32> -> vector<16x128xf32>
    %10 = arith.addf %6, %9 : vector<16x128xf32>
    %c0_13 = arith.constant 0 : index
    %c0_14 = arith.constant 0 : index
    %11 = vector.load %arg7[%c0_13, %c0_14] : memref<1x128xf32, #tpu.memory_space<vmem>>, vector<1x128xf32>
    %12 = vector.broadcast %11 : vector<1x128xf32> to vector<16x128xf32>
    %13 = arith.addf %10, %12 : vector<16x128xf32>
    %cst_15 = arith.constant 0.000000e+00 : f32
    %14 = vector.broadcast %cst_15 : f32 to vector<16x128xf32>
    %15 = arith.maximumf %13, %14 : vector<16x128xf32>
    %c0_16 = arith.constant 0 : index
    %c0_17 = arith.constant 0 : index
    %16 = vector.load %arg8[%c0_16, %c0_17] : memref<128x32xf32, #tpu.memory_space<vmem>>, vector<128x32xf32>
    %cst_18 = arith.constant dense<0.000000e+00> : vector<16x32xf32>
    %17 = tpu.matmul %15, %16, %cst_18 {dimension_numbers = #tpu.dot_dimension_numbers<[1], [0], [0], [1], [0, 0, 1, 1], [], []>} : vector<16x128xf32>, vector<128x32xf32>, vector<16x32xf32> -> vector<16x32xf32>
    %c0_19 = arith.constant 0 : index
    %c0_20 = arith.constant 0 : index
    %18 = vector.load %arg9[%c0_19, %c0_20] : memref<1x32xf32, #tpu.memory_space<vmem>>, vector<1x32xf32>
    %19 = vector.broadcast %18 : vector<1x32xf32> to vector<16x32xf32>
    %20 = arith.addf %17, %19 : vector<16x32xf32>
    %cst_21 = arith.constant 0.000000e+00 : f32
    %21 = vector.broadcast %cst_21 : f32 to vector<16x32xf32>
    %22 = arith.maximumf %20, %21 : vector<16x32xf32>
    %c0_22 = arith.constant 0 : index
    %c0_23 = arith.constant 0 : index
    %23 = vector.load %arg10[%c0_22, %c0_23] : memref<16x32xf32, #tpu.memory_space<vmem>>, vector<16x32xf32>
    tpu.vector_store %arg10[%c0_22, %c0_23], %22 {strides = array<i32>} : memref<16x32xf32, #tpu.memory_space<vmem>>, vector<16x32xf32>,
    return
  }
  func.func @transform_0(%arg0: i32) -> (i32, i32) {
    %c0_i32 = arith.constant 0 : i32
    %c0_i32_0 = arith.constant 0 : i32
    return %arg0, %c0_i32 : i32, i32
  }
  func.func @transform_1(%arg0: i32) -> (i32, i32) {
    %c0_i32 = arith.constant 0 : i32
    %c0_i32_0 = arith.constant 0 : i32
    return %arg0, %c0_i32 : i32, i32
  }
  func.func @transform_2(%arg0: i32) -> (i32, i32) {
    %c0_i32 = arith.constant 0 : i32
    %c0_i32_0 = arith.constant 0 : i32
    return %arg0, %c0_i32 : i32, i32
  }
  func.func @transform_3(%arg0: i32) -> (i32, i32) {
    %c0_i32 = arith.constant 0 : i32
    %c0_i32_0 = arith.constant 0 : i32
    %c0_i32_1 = arith.constant 0 : i32
    return %c0_i32, %c0_i32_0 : i32, i32
  }
  func.func @transform_4(%arg0: i32) -> (i32, i32) {
    %c0_i32 = arith.constant 0 : i32
    %c0_i32_0 = arith.constant 0 : i32
    %c0_i32_1 = arith.constant 0 : i32
    return %c0_i32, %c0_i32_0 : i32, i32
  }
  func.func @transform_5(%arg0: i32) -> (i32, i32) {
    %c0_i32 = arith.constant 0 : i32
    %c0_i32_0 = arith.constant 0 : i32
    %c0_i32_1 = arith.constant 0 : i32
    return %c0_i32, %c0_i32_0 : i32, i32
  }
  func.func @transform_6(%arg0: i32) -> (i32, i32) {
    %c0_i32 = arith.constant 0 : i32
    %c0_i32_0 = arith.constant 0 : i32
    %c0_i32_1 = arith.constant 0 : i32
    return %c0_i32, %c0_i32_0 : i32, i32
  }
  func.func @transform_7(%arg0: i32) -> (i32, i32) {
    %c0_i32 = arith.constant 0 : i32
    %c0_i32_0 = arith.constant 0 : i32
    %c0_i32_1 = arith.constant 0 : i32
    return %c0_i32, %c0_i32_0 : i32, i32
  }
  func.func @transform_8(%arg0: i32) -> (i32, i32) {
    %c0_i32 = arith.constant 0 : i32
    %c0_i32_0 = arith.constant 0 : i32
    %c0_i32_1 = arith.constant 0 : i32
    return %c0_i32, %c0_i32_0 : i32, i32
  }
  func.func @transform_9(%arg0: i32) -> (i32, i32) {
    %c0_i32 = arith.constant 0 : i32
    %c0_i32_0 = arith.constant 0 : i32
    return %arg0, %c0_i32 : i32, i32
  }
}

</mosaic_0001>

<llo_original>
// kernel: tpu_custom_call.1
$region0: #{tpu_custom_call.1}
  #allocation0 [shape = 'u32[]', space=smem, size = 0x4, offset = 0x4, fixed_abs, tag = 'smem constant byte address 0x4 - core index']
  #allocation1 [shape = 'u32[144,128]{1,0:T(1,128)}', space=vmem, size = 0x12000, scoped, tag = 'internal scratch']
  %s0 = inlined_call_operand.vmem [shape: f32[16,32], index: 0, kind: input, shape index: {}]
  %s1 = inlined_call_operand.vmem [shape: f32[16,32], index: 1, kind: input, shape index: {}]
  %s2 = inlined_call_operand.vmem [shape: f32[16,16], index: 2, kind: input, shape index: {}]
  %s3 = inlined_call_operand.vmem [shape: f32[32,128], index: 3, kind: input, shape index: {}]
  %s4 = inlined_call_operand.vmem [shape: f32[32,128], index: 4, kind: input, shape index: {}]
  %s5 = inlined_call_operand.vmem [shape: f32[16,128], index: 5, kind: input, shape index: {}]
  %s6 = inlined_call_operand.vmem [shape: f32[1,128], index: 6, kind: input, shape index: {}]
  %s7 = inlined_call_operand.vmem [shape: f32[128,32], index: 7, kind: input, shape index: {}]
  %s8 = inlined_call_operand.vmem [shape: f32[1,32], index: 8, kind: input, shape index: {}]
  %s9 = inlined_call_operand.hbm [shape: f32[16,32], index: 9, kind: output, shape index: {}]
  %s10 = sld [smem:[#allocation0]]
  $region46: #{tpu_custom_call.1} parent=0
    _
  %s12 = ssub.s32 1, %s10
  %s13 = scalar_select 0, %s12, %s10
  $region1: #{tpu_custom_call.1} parent=0
    #allocation2 [shape = 'u8[8192]{0}', space=vmem, size = 0x2000, scoped, tag = 'output window, operand 0, single buffered']
    #allocation3 [shape = 's32[1]{0}', space=sflag, size = 0x4, scoped, tag = 'scoped memory for tpu_custom_call.1']
    %14 = vsyncpa [#allocation3], 0
    // Predicated region
    $region2: #{tpu_custom_call.1} parent=1 // pred_check
      _
    $region3: #{tpu_custom_call.1} parent=1 // pred_check_branch
      %16 = sbr.rel (0) target = $region5
    $region4: #{tpu_custom_call.1} parent=1 // pred_region
      _
    $region5: #{tpu_custom_call.1} parent=1 // pred_fallthru
      _
    // Predicated region
    $region6: #{tpu_custom_call.1} parent=1 // pred_check
      _
    $region7: #{tpu_custom_call.1} parent=1 // pred_check_branch
      %18 = sbr.rel (0) target = $region9
    $region8: #{tpu_custom_call.1} parent=1 // pred_region
      _
    $region9: #{tpu_custom_call.1} parent=1 // pred_fallthru
      _
    // Predicated region
    $region10: #{tpu_custom_call.1} parent=1 // pred_check
      _
    $region11: #{tpu_custom_call.1} parent=1 // pred_check_branch
      %20 = sbr.rel (0) target = $region13
    $region12: #{tpu_custom_call.1} parent=1 // pred_region
      _
    $region13: #{tpu_custom_call.1} parent=1 // pred_fallthru
      _
    // Predicated region
    $region14: #{tpu_custom_call.1} parent=1 // pred_check
      _
    $region15: #{tpu_custom_call.1} parent=1 // pred_check_branch
      %22 = sbr.rel (0) target = $region17
    $region16: #{tpu_custom_call.1} parent=1 // pred_region
      _
    $region17: #{tpu_custom_call.1} parent=1 // pred_fallthru
      _
    // Predicated region
    $region18: #{tpu_custom_call.1} parent=1 // pred_check
      _
    $region19: #{tpu_custom_call.1} parent=1 // pred_check_branch
      %24 = sbr.rel (0) target = $region21
    $region20: #{tpu_custom_call.1} parent=1 // pred_region
      _
    $region21: #{tpu_custom_call.1} parent=1 // pred_fallthru
      _
    // Predicated region
    $region22: #{tpu_custom_call.1} parent=1 // pred_check
      _
    $region23: #{tpu_custom_call.1} parent=1 // pred_check_branch
      %26 = sbr.rel (0) target = $region25
    $region24: #{tpu_custom_call.1} parent=1 // pred_region
      _
    $region25: #{tpu_custom_call.1} parent=1 // pred_fallthru
      _
    // Predicated region
    $region26: #{tpu_custom_call.1} parent=1 // pred_check
      _
    $region27: #{tpu_custom_call.1} parent=1 // pred_check_branch
      %28 = sbr.rel (0) target = $region29
    $region28: #{tpu_custom_call.1} parent=1 // pred_region
      _
    $region29: #{tpu_custom_call.1} parent=1 // pred_fallthru
      _
    // Predicated region
    $region30: #{tpu_custom_call.1} parent=1 // pred_check
      _
    $region31: #{tpu_custom_call.1} parent=1 // pred_check_branch
      %30 = sbr.rel (0) target = $region33
    $region32: #{tpu_custom_call.1} parent=1 // pred_region
      _
    $region33: #{tpu_custom_call.1} parent=1 // pred_fallthru
      _
    // Predicated region
    $region34: #{tpu_custom_call.1} parent=1 // pred_check
      _
    $region35: #{tpu_custom_call.1} parent=1 // pred_check_branch
      %32 = sbr.rel (0) target = $region37
    $region36: #{tpu_custom_call.1} parent=1 // pred_region
      _
    $region37: #{tpu_custom_call.1} parent=1 // pred_fallthru
      _
    %v33 = vld [vmem:[%s0] sm:$0xff]
    %v34 = vld [vmem:[%s0 + $0x8] sm:$0xff]
    %v35 = vld [vmem:[%s3] sm:$0xff]
    %v36 = vld [vmem:[%s3 + $0x8] sm:$0xff]
    %v37 = vld [vmem:[%s3 + $0x10] sm:$0xff]
    %v38 = vld [vmem:[%s3 + $0x18] sm:$0xff]
    %v39 = vld [vmem:[%s1] sm:$0xff]
    %v40 = vld [vmem:[%s1 + $0x8] sm:$0xff]
    %v41 = vld [vmem:[%s4] sm:$0xff]
    %v42 = vld [vmem:[%s4 + $0x8] sm:$0xff]
    %v43 = vld [vmem:[%s4 + $0x10] sm:$0xff]
    %v44 = vld [vmem:[%s4 + $0x18] sm:$0xff]
    %vm45 = vcmask 261120
    %v47 = vsel %vm45, %v39, 0
    %v50 = vsel %vm45, %v40, 0
    %52 = vmatprep.subr.mxu0 0.0
    %53 = vmatpush1.msra.mxu0 %v41
    %54 = vmatprep.subr.mxu0 0.0
    %55 = vmatpush1.msra.mxu0 %v42
    %56 = vmatprep.subr.mxu0 0.0
    %57 = vmatpush1.msra.mxu0 %v43
    %58 = vmatprep.subr.mxu0 0.0
    %59 = vmatpush1.msra.mxu0 %v44
    %60 = vmatprep.subr.mxu0 0.0
    %61 = vmatpush1.msra.mxu0 0.0
    %62 = vmatprep.subr.mxu0 0.0
    %63 = vmatpush1.msra.mxu0 0.0
    %64 = vmatprep.subr.mxu0 0.0
    %65 = vmatpush1.msra.mxu0 0.0
    %66 = vmatprep.subr.mxu0 0.0
    %67 = vmatpush1.msra.mxu0 0.0
    %68 = vmatprep.subr.mxu0 0.0
    %69 = vmatpush1.msra.mxu0 0.0
    %70 = vmatprep.subr.mxu0 0.0
    %71 = vmatpush1.msra.mxu0 0.0
    %72 = vmatprep.subr.mxu0 0.0
    %73 = vmatpush1.msra.mxu0 0.0
    %74 = vmatprep.subr.mxu0 0.0
    %75 = vmatpush1.msra.mxu0 0.0
    %76 = vmatprep.subr.mxu0 0.0
    %77 = vmatpush1.msra.mxu0 0.0
    %78 = vmatprep.subr.mxu0 0.0
    %79 = vmatpush1.msra.mxu0 0.0
    %80 = vmatprep.subr.mxu0 0.0
    %81 = vmatpush1.msra.mxu0 0.0
    %82 = vmatprep.subr.mxu0 0.0
    %83 = vmatpush1.msra.mxu0 0.0
    %84 = vmatprep.subr.mxu0 0.0
    %85 = vmatpush1.msra.mxu0 0.0
    %86 = vmatprep.subr.mxu0 0.0
    %87 = vmatpush1.msra.mxu0 0.0
    %88 = vmatprep.subr.mxu0 0.0
    %89 = vmatpush1.msra.mxu0 0.0
    %90 = vmatprep.subr.mxu0 0.0
    %91 = vmatpush1.msra.mxu0 0.0
    %92 = vmatprep.subr.mxu0 0.0
    %93 = vmatpush1.msra.mxu0 0.0
    %94 = vmatprep.subr.mxu0 0.0
    %95 = vmatpush1.msra.mxu0 0.0
    %96 = vmatprep.subr.mxu0 0.0
    %97 = vmatpush1.msra.mxu0 0.0
    %98 = vmatprep.subr.mxu0 0.0
    %99 = vmatpush1.msra.mxu0 0.0
    %100 = vmatprep.subr.mxu0 0.0
    %101 = vmatpush1.msra.mxu0 0.0
    %102 = vmatprep.subr.mxu0 0.0
    %103 = vmatpush1.msra.mxu0 0.0
    %104 = vmatprep.subr.mxu0 0.0
    %105 = vmatpush1.msra.mxu0 0.0
    %106 = vmatprep.subr.mxu0 0.0
    %107 = vmatpush1.msra.mxu0 0.0
    %108 = vmatprep.subr.mxu0 0.0
    %109 = vmatpush1.msra.mxu0 0.0
    %110 = vmatprep.subr.mxu0 0.0
    %111 = vmatpush1.msra.mxu0 0.0
    %112 = vmatprep.subr.mxu0 0.0
    %113 = vmatpush1.msra.mxu0 0.0
    %114 = vmatprep.subr.mxu0 0.0
    %115 = vmatpush1.msra.mxu0 0.0
    %116 = vmatprep.mubr.f32.mxu0 0.0
    %117 = vmatmul.mubr.f32.gmra.mrb[0].mxu0 %v47
    %v118 = vpop.f32.mrb[0].mxu0
    %v119 = vadd.f32 0.0, %v118
    %v120 = vpop.f32.mrb[0].mxu0
    %121 = vmatprep.mubr.f32.mxu0 0.0
    %122 = vmatmul.mubr.f32.gmra.mrb[0].mxu0 %v50
    %v123 = vpop.f32.mrb[0].mxu0
    %v124 = vadd.f32 0.0, %v123
    %v125 = vpop.f32.mrb[0].mxu0
    %126 = vdwg.mxu0
    %v128 = vsel %vm45, %v33, 0
    %v131 = vsel %vm45, %v34, 0
    %133 = vmatprep.subr.mxu0 0.0
    %134 = vmatpush1.msra.mxu0 %v35
    %135 = vmatprep.subr.mxu0 0.0
    %136 = vmatpush1.msra.mxu0 %v36
    %137 = vmatprep.subr.mxu0 0.0
    %138 = vmatpush1.msra.mxu0 %v37
    %139 = vmatprep.subr.mxu0 0.0
    %140 = vmatpush1.msra.mxu0 %v38
    %141 = vmatprep.subr.mxu0 0.0
    %142 = vmatpush1.msra.mxu0 0.0
    %143 = vmatprep.subr.mxu0 0.0
    %144 = vmatpush1.msra.mxu0 0.0
    %145 = vmatprep.subr.mxu0 0.0
    %146 = vmatpush1.msra.mxu0 0.0
    %147 = vmatprep.subr.mxu0 0.0
    %148 = vmatpush1.msra.mxu0 0.0
    %149 = vmatprep.subr.mxu0 0.0
    %150 = vmatpush1.msra.mxu0 0.0
    %151 = vmatprep.subr.mxu0 0.0
    %152 = vmatpush1.msra.mxu0 0.0
    %153 = vmatprep.subr.mxu0 0.0
    %154 = vmatpush1.msra.mxu0 0.0
    %155 = vmatprep.subr.mxu0 0.0
    %156 = vmatpush1.msra.mxu0 0.0
    %157 = vmatprep.subr.mxu0 0.0
    %158 = vmatpush1.msra.mxu0 0.0
    %159 = vmatprep.subr.mxu0 0.0
    %160 = vmatpush1.msra.mxu0 0.0
    %161 = vmatprep.subr.mxu0 0.0
    %162 = vmatpush1.msra.mxu0 0.0
    %163 = vmatprep.subr.mxu0 0.0
    %164 = vmatpush1.msra.mxu0 0.0
    %165 = vmatprep.subr.mxu0 0.0
    %166 = vmatpush1.msra.mxu0 0.0
    %167 = vmatprep.subr.mxu0 0.0
    %168 = vmatpush1.msra.mxu0 0.0
    %169 = vmatprep.subr.mxu0 0.0
    %170 = vmatpush1.msra.mxu0 0.0
    %171 = vmatprep.subr.mxu0 0.0
    %172 = vmatpush1.msra.mxu0 0.0
    %173 = vmatprep.subr.mxu0 0.0
    %174 = vmatpush1.msra.mxu0 0.0
    %175 = vmatprep.subr.mxu0 0.0
    %176 = vmatpush1.msra.mxu0 0.0
    %177 = vmatprep.subr.mxu0 0.0
    %178 = vmatpush1.msra.mxu0 0.0
    %179 = vmatprep.subr.mxu0 0.0
    %180 = vmatpush1.msra.mxu0 0.0
    %181 = vmatprep.subr.mxu0 0.0
    %182 = vmatpush1.msra.mxu0 0.0
    %183 = vmatprep.subr.mxu0 0.0
    %184 = vmatpush1.msra.mxu0 0.0
    %185 = vmatprep.subr.mxu0 0.0
    %186 = vmatpush1.msra.mxu0 0.0
    %187 = vmatprep.subr.mxu0 0.0
    %188 = vmatpush1.msra.mxu0 0.0
    %189 = vmatprep.subr.mxu0 0.0
    %190 = vmatpush1.msra.mxu0 0.0
    %191 = vmatprep.subr.mxu0 0.0
    %192 = vmatpush1.msra.mxu0 0.0
    %193 = vmatprep.subr.mxu0 0.0
    %194 = vmatpush1.msra.mxu0 0.0
    %195 = vmatprep.subr.mxu0 0.0
    %196 = vmatpush1.msra.mxu0 0.0
    %197 = vmatprep.mubr.f32.mxu0 0.0
    %198 = vmatmul.mubr.f32.gmra.mrb[0].mxu0 %v128
    %v199 = vpop.f32.mrb[0].mxu0
    %v200 = vadd.f32 %v119, %v199
    %v201 = vpop.f32.mrb[0].mxu0
    %202 = vmatprep.mubr.f32.mxu0 0.0
    %203 = vmatmul.mubr.f32.gmra.mrb[0].mxu0 %v131
    %v204 = vpop.f32.mrb[0].mxu0
    %v205 = vadd.f32 %v124, %v204
    %v206 = vpop.f32.mrb[0].mxu0
    %207 = vdwg.mxu0
    %v208 = vld [vmem:[%s2] sm:$0xff]
    %v209 = vld [vmem:[%s2 + $0x8] sm:$0xff]
    %v210 = vld [vmem:[%s5] sm:$0xff]
    %v211 = vld [vmem:[%s5 + $0x8] sm:$0xff]
    %vm212 = vcmask 130048
    %v214 = vsel %vm212, %v208, 0
    %v217 = vsel %vm212, %v209, 0
    %219 = vmatprep.subr.mxu0 0.0
    %220 = vmatpush1.msra.mxu0 %v210
    %221 = vmatprep.subr.mxu0 0.0
    %222 = vmatpush1.msra.mxu0 %v211
    %223 = vmatprep.subr.mxu0 0.0
    %224 = vmatpush1.msra.mxu0 0.0
    %225 = vmatprep.subr.mxu0 0.0
    %226 = vmatpush1.msra.mxu0 0.0
    %227 = vmatprep.subr.mxu0 0.0
    %228 = vmatpush1.msra.mxu0 0.0
    %229 = vmatprep.subr.mxu0 0.0
    %230 = vmatpush1.msra.mxu0 0.0
    %231 = vmatprep.subr.mxu0 0.0
    %232 = vmatpush1.msra.mxu0 0.0
    %233 = vmatprep.subr.mxu0 0.0
    %234 = vmatpush1.msra.mxu0 0.0
    %235 = vmatprep.subr.mxu0 0.0
    %236 = vmatpush1.msra.mxu0 0.0
    %237 = vmatprep.subr.mxu0 0.0
    %238 = vmatpush1.msra.mxu0 0.0
    %239 = vmatprep.subr.mxu0 0.0
    %240 = vmatpush1.msra.mxu0 0.0
    %241 = vmatprep.subr.mxu0 0.0
    %242 = vmatpush1.msra.mxu0 0.0
    %243 = vmatprep.subr.mxu0 0.0
    %244 = vmatpush1.msra.mxu0 0.0
    %245 = vmatprep.subr.mxu0 0.0
    %246 = vmatpush1.msra.mxu0 0.0
    %247 = vmatprep.subr.mxu0 0.0
    %248 = vmatpush1.msra.mxu0 0.0
    %249 = vmatprep.subr.mxu0 0.0
    %250 = vmatpush1.msra.mxu0 0.0
    %251 = vmatprep.subr.mxu0 0.0
    %252 = vmatpush1.msra.mxu0 0.0
    %253 = vmatprep.subr.mxu0 0.0
    %254 = vmatpush1.msra.mxu0 0.0
    %255 = vmatprep.subr.mxu0 0.0
    %256 = vmatpush1.msra.mxu0 0.0
    %257 = vmatprep.subr.mxu0 0.0
    %258 = vmatpush1.msra.mxu0 0.0
    %259 = vmatprep.subr.mxu0 0.0
    %260 = vmatpush1.msra.mxu0 0.0
    %261 = vmatprep.subr.mxu0 0.0
    %262 = vmatpush1.msra.mxu0 0.0
    %263 = vmatprep.subr.mxu0 0.0
    %264 = vmatpush1.msra.mxu0 0.0
    %265 = vmatprep.subr.mxu0 0.0
    %266 = vmatpush1.msra.mxu0 0.0
    %267 = vmatprep.subr.mxu0 0.0
    %268 = vmatpush1.msra.mxu0 0.0
    %269 = vmatprep.subr.mxu0 0.0
    %270 = vmatpush1.msra.mxu0 0.0
    %271 = vmatprep.subr.mxu0 0.0
    %272 = vmatpush1.msra.mxu0 0.0
    %273 = vmatprep.subr.mxu0 0.0
    %274 = vmatpush1.msra.mxu0 0.0
    %275 = vmatprep.subr.mxu0 0.0
    %276 = vmatpush1.msra.mxu0 0.0
    %277 = vmatprep.subr.mxu0 0.0
    %278 = vmatpush1.msra.mxu0 0.0
    %279 = vmatprep.subr.mxu0 0.0
    %280 = vmatpush1.msra.mxu0 0.0
    %281 = vmatprep.subr.mxu0 0.0
    %282 = vmatpush1.msra.mxu0 0.0
    %283 = vmatprep.mubr.f32.mxu0 0.0
    %284 = vmatmul.mubr.f32.gmra.mrb[0].mxu0 %v214
    %v285 = vpop.f32.mrb[0].mxu0
    %v286 = vadd.f32 0.0, %v285
    %v287 = vpop.f32.mrb[0].mxu0
    %288 = vmatprep.mubr.f32.mxu0 0.0
    %289 = vmatmul.mubr.f32.gmra.mrb[0].mxu0 %v217
    %v290 = vpop.f32.mrb[0].mxu0
    %v291 = vadd.f32 0.0, %v290
    %v292 = vpop.f32.mrb[0].mxu0
    %293 = vdwg.mxu0
    %v294 = vadd.f32 %v200, %v286
    %v295 = vadd.f32 %v205, %v291
    %v296 = vld [vmem:[%s6] sm:$0x1]
    %v298 = vlaneseq
    %v299 = vshrl.u32 %v298, 7
    %v300 = vsub.s32 0, %v299
    %v301 = vrot.slane %v296, %v300
    %v303 = vadd.f32 %v294, %v301
    %v304 = vadd.f32 %v295, %v301
    %v305 = vmax.f32 %v303, 0.0
    %v306 = vmax.f32 %v304, 0.0
    %v307 = vld [vmem:[%s7] sm:$0xff]
    %v308 = vld [vmem:[%s7 + $0x8] sm:$0xff]
    %v309 = vld [vmem:[%s7 + $0x10] sm:$0xff]
    %v310 = vld [vmem:[%s7 + $0x18] sm:$0xff]
    %v311 = vld [vmem:[%s7 + $0x20] sm:$0xff]
    %v312 = vld [vmem:[%s7 + $0x28] sm:$0xff]
    %v313 = vld [vmem:[%s7 + $0x30] sm:$0xff]
    %v314 = vld [vmem:[%s7 + $0x38] sm:$0xff]
    %v315 = vld [vmem:[%s7 + $0x40] sm:$0xff]
    %v316 = vld [vmem:[%s7 + $0x48] sm:$0xff]
    %v317 = vld [vmem:[%s7 + $0x50] sm:$0xff]
    %v318 = vld [vmem:[%s7 + $0x58] sm:$0xff]
    %v319 = vld [vmem:[%s7 + $0x60] sm:$0xff]
    %v320 = vld [vmem:[%s7 + $0x68] sm:$0xff]
    %v321 = vld [vmem:[%s7 + $0x70] sm:$0xff]
    %v322 = vld [vmem:[%s7 + $0x78] sm:$0xff]
    %v323 = vld [vmem:[%s8] sm:$0x1]
    %v325 = vlaneseq
    %v326 = vshrl.u32 %v325, 7
    %v327 = vsub.s32 0, %v326
    %v328 = vrot.slane %v323, %v327
    %330 = vmatprep.subr.mxu0 0.0
    %331 = vmatpush1.msra.mxu0 %v307
    %332 = vmatprep.subr.mxu0 0.0
    %333 = vmatpush1.msra.mxu0 %v308
    %334 = vmatprep.subr.mxu0 0.0
    %335 = vmatpush1.msra.mxu0 %v309
    %336 = vmatprep.subr.mxu0 0.0
    %337 = vmatpush1.msra.mxu0 %v310
    %338 = vmatprep.subr.mxu0 0.0
    %339 = vmatpush1.msra.mxu0 %v311
    %340 = vmatprep.subr.mxu0 0.0
    %341 = vmatpush1.msra.mxu0 %v312
    %342 = vmatprep.subr.mxu0 0.0
    %343 = vmatpush1.msra.mxu0 %v313
    %344 = vmatprep.subr.mxu0 0.0
    %345 = vmatpush1.msra.mxu0 %v314
    %346 = vmatprep.subr.mxu0 0.0
    %347 = vmatpush1.msra.mxu0 %v315
    %348 = vmatprep.subr.mxu0 0.0
    %349 = vmatpush1.msra.mxu0 %v316
    %350 = vmatprep.subr.mxu0 0.0
    %351 = vmatpush1.msra.mxu0 %v317
    %352 = vmatprep.subr.mxu0 0.0
    %353 = vmatpush1.msra.mxu0 %v318
    %354 = vmatprep.subr.mxu0 0.0
    %355 = vmatpush1.msra.mxu0 %v319
    %356 = vmatprep.subr.mxu0 0.0
    %357 = vmatpush1.msra.mxu0 %v320
    %358 = vmatprep.subr.mxu0 0.0
    %359 = vmatpush1.msra.mxu0 %v321
    %360 = vmatprep.subr.mxu0 0.0
    %361 = vmatpush1.msra.mxu0 %v322
    %362 = vmatprep.subr.mxu0 0.0
    %363 = vmatpush1.msra.mxu0 0.0
    %364 = vmatprep.subr.mxu0 0.0
    %365 = vmatpush1.msra.mxu0 0.0
    %366 = vmatprep.subr.mxu0 0.0
    %367 = vmatpush1.msra.mxu0 0.0
    %368 = vmatprep.subr.mxu0 0.0
    %369 = vmatpush1.msra.mxu0 0.0
    %370 = vmatprep.subr.mxu0 0.0
    %371 = vmatpush1.msra.mxu0 0.0
    %372 = vmatprep.subr.mxu0 0.0
    %373 = vmatpush1.msra.mxu0 0.0
    %374 = vmatprep.subr.mxu0 0.0
    %375 = vmatpush1.msra.mxu0 0.0
    %376 = vmatprep.subr.mxu0 0.0
    %377 = vmatpush1.msra.mxu0 0.0
    %378 = vmatprep.subr.mxu0 0.0
    %379 = vmatpush1.msra.mxu0 0.0
    %380 = vmatprep.subr.mxu0 0.0
    %381 = vmatpush1.msra.mxu0 0.0
    %382 = vmatprep.subr.mxu0 0.0
    %383 = vmatpush1.msra.mxu0 0.0
    %384 = vmatprep.subr.mxu0 0.0
    %385 = vmatpush1.msra.mxu0 0.0
    %386 = vmatprep.subr.mxu0 0.0
    %387 = vmatpush1.msra.mxu0 0.0
    %388 = vmatprep.subr.mxu0 0.0
    %389 = vmatpush1.msra.mxu0 0.0
    %390 = vmatprep.subr.mxu0 0.0
    %391 = vmatpush1.msra.mxu0 0.0
    %392 = vmatprep.subr.mxu0 0.0
    %393 = vmatpush1.msra.mxu0 0.0
    %394 = vmatprep.mubr.f32.mxu0 0.0
    %395 = vmatmul.mubr.f32.gmra.mrb[0].mxu0 %v305
    %v396 = vpop.f32.mrb[0].mxu0
    %v397 = vadd.f32 %v328, %v396
    %v398 = vpop.f32.mrb[0].mxu0
    %399 = vmatprep.mubr.f32.mxu0 0.0
    %400 = vmatmul.mubr.f32.gmra.mrb[0].mxu0 %v306
    %v401 = vpop.f32.mrb[0].mxu0
    %v402 = vadd.f32 %v328, %v401
    %v403 = vpop.f32.mrb[0].mxu0
    %404 = vdwg.mxu0
    %v405 = vmax.f32 %v397, 0.0
    %v406 = vmax.f32 %v402, 0.0
    %407 = vst.msk [vmem:[#allocation2] sm:$0xff] %vm45, %v405
    %408 = vst.msk [vmem:[#allocation2 + $0x8] sm:$0xff] %vm45, %v406
    // Predicated region
    $region38: #{tpu_custom_call.1} parent=1 // pred_check
      _
    $region39: #{tpu_custom_call.1} parent=1 // pred_check_branch
      %410 = sbr.rel (0) target = $region41
    $region40: #{tpu_custom_call.1} parent=1 // pred_region
      %s412 = ssub.s32 256, 256
      %413 = vsyncadd [#allocation3], %s412
      %s414 = sshll.u32 [#allocation2], 4
      %s415 = int_to_ptr.vmem [resolvable:$true] %s414
      %420 = dma.vmem_to_hbm [thread:$0]  %s415, 256, %s9, [#allocation3], 128, 128, 8
    $region41: #{tpu_custom_call.1} parent=1 // pred_fallthru
      _
    // Predicated region
    $region42: #{tpu_custom_call.1} parent=1 // pred_check
      _
    $region43: #{tpu_custom_call.1} parent=1 // pred_check_branch
      %422 = sbr.rel (0) target = $region45
    $region44: #{tpu_custom_call.1} parent=1 // pred_region
      %423 = dma.done [#allocation3], 256
    $region45: #{tpu_custom_call.1} parent=1 // pred_fallthru
      _
    %424 = vsyncpa [#allocation3], 1

</llo_original>
